<compile_context>
chip_gen: v7x
topology: tpu7x:2x2x1
jax: 0.10.0
libtpu: 0.0.40
codegen_flags: <defaults>
</compile_context>

<pallas_src>
import functools

import numpy as np
import jax
import jax.numpy as jnp
from jax import lax
from jax.experimental import pallas as pl
from jax.experimental.pallas import tpu as pltpu


_VMEM = pl.BlockSpec(memory_space=pltpu.MemorySpace.VMEM)


# ----------------------------- Pallas kernels -----------------------------

def _gcn_first_kernel(adj_ref, x_ref, w_ref, b_ref, o_ref):
    # out = A_hat @ (X @ W) + b   (single GCNConv, no input ReLU)
    xw = jnp.dot(x_ref[...], w_ref[...], preferred_element_type=jnp.float32)
    o_ref[...] = (jnp.dot(adj_ref[...], xw.astype(jnp.bfloat16),
                          preferred_element_type=jnp.float32) + b_ref[...])


def _gcn_block_kernel(adj_ref, h_ref, w_ref, b_ref, p_ref, o_ref, s_ref, *,
                      n_layers):
    # Fused block: n_layers x (ReLU -> GCNConv) with h resident on-chip,
    # followed by the TopKPooling score as a second output.
    adj = adj_ref[...]                                    # [N, N] bf16, loaded once

    def body(l, h):
        x = jnp.maximum(h, 0.0).astype(jnp.bfloat16)      # fused ReLU(inplace)
        xw = jnp.dot(x, w_ref[l], preferred_element_type=jnp.float32)
        h = jnp.dot(adj, xw.astype(jnp.bfloat16),
                    preferred_element_type=jnp.float32)
        return h + b_ref[l]

    h = lax.fori_loop(0, n_layers, body, h_ref[...], unroll=True)
    o_ref[...] = h                                        # single store per block
    # TopK score tanh(h @ p_unit): VPU multiply + XLU lane reduce; MXU stays free.
    s_ref[...] = jnp.tanh(jnp.sum(h * p_ref[...], axis=-1, keepdims=True))


def _pool_linear_kernel(pool_ref, x_ref, w_ref, b_ref, o_ref):
    # logits = (P_mean @ X) @ W + b
    pooled = jnp.dot(pool_ref[...], x_ref[...], preferred_element_type=jnp.float32)
    o_ref[...] = (jnp.dot(pooled.astype(jnp.bfloat16), w_ref[...],
                          preferred_element_type=jnp.float32) + b_ref[...])


# ---------------------------- kernel wrappers ------------------------------
# TODO(synk): for large batched graphs (N >~ 2k) the dense A_hat must be
# row-tiled with an explicit grid ("parallel" axis for v7x's 2 TCs) and
# vmem_limit_bytes set; at these sizes whole-array VMEM residency is optimal.

def gcn_first(adj_bf16, x, w, b):
    n, fout = x.shape[0], w.shape[1]
    return pl.pallas_call(
        _gcn_first_kernel,
        out_shape=jax.ShapeDtypeStruct((n, fout), jnp.float32),
        in_specs=[_VMEM] * 4,
        out_specs=_VMEM,
    )(adj_bf16, x.astype(jnp.bfloat16), w.astype(jnp.bfloat16),
      b.reshape(1, fout).astype(jnp.float32))


def gcn_block(adj_bf16, h, w_stack, b_stack, p_unit):
    n, hid = h.shape
    n_layers = w_stack.shape[0]
    kernel = functools.partial(_gcn_block_kernel, n_layers=n_layers)
    return pl.pallas_call(
        kernel,
        out_shape=(jax.ShapeDtypeStruct((n, hid), jnp.float32),
                   jax.ShapeDtypeStruct((n, 1), jnp.float32)),
        in_specs=[_VMEM] * 5,
        out_specs=(_VMEM, _VMEM),
    )(adj_bf16, h, w_stack.astype(jnp.bfloat16),
      b_stack.reshape(n_layers, 1, hid).astype(jnp.float32),
      p_unit.astype(jnp.float32))


def pool_linear(pool, x, w, b):
    g, fout = pool.shape[0], w.shape[1]
    return pl.pallas_call(
        _pool_linear_kernel,
        out_shape=jax.ShapeDtypeStruct((g, fout), jnp.float32),
        in_specs=[_VMEM] * 4,
        out_specs=_VMEM,
    )(pool.astype(jnp.bfloat16), x.astype(jnp.bfloat16),
      w.astype(jnp.bfloat16), b.reshape(1, fout).astype(jnp.float32))


# -------------------------- device-side glue (jitted) -----------------------

def _normalize_adj(a_raw, alive):
    """GCN-normalized dense adjacency restricted to alive nodes, self-loops added."""
    a = a_raw * alive[:, None] * alive[None, :]
    n = a.shape[0]
    eye = jnp.eye(n, dtype=a.dtype)
    diag = jnp.diagonal(a)
    new_diag = jnp.where(diag == 0.0, alive, diag)   # add_remaining_self_loops
    a = a * (1.0 - eye) + eye * new_diag[None, :]
    deg = jnp.sum(a, axis=1)
    dinv = jnp.where(deg > 0.0, lax.rsqrt(jnp.maximum(deg, 1e-12)), 0.0)
    return dinv[:, None] * a * dinv[None, :]


def _topk_keep_mask(scores, batch, alive, ratio):
    """Per-graph top-ceil(ratio*n_g) selection as a fixed-shape 0/1 mask (on device)."""
    s = scores[:, 0]
    n = s.shape[0]
    idx = jnp.arange(n)
    same_graph = batch[:, None] == batch[None, :]
    competitors = same_graph & (alive[None, :] > 0.0)
    ahead = (s[None, :] > s[:, None]) | (
        (s[None, :] == s[:, None]) & (idx[None, :] < idx[:, None]))
    rank = jnp.sum((competitors & ahead).astype(jnp.float32), axis=1)
    n_g = jnp.sum(competitors.astype(jnp.float32), axis=1)
    k = jnp.ceil(ratio * n_g)
    keep = (alive > 0.0) & (rank < k)
    return keep.astype(jnp.float32)


def forward(params, x_int, edge_index, batch, num_graphs, ratio=0.6):
    n = x_int.shape[0]

    # ---- positional-encoding feature assembly (matches the torch reference,
    #      including its dim-0 cat + reshape(-1, 2)) ----
    glyphs = x_int[:, 0]
    xpos = x_int[:, 1:2].astype(jnp.float32)
    ypos = x_int[:, 2:3].astype(jnp.float32)
    is_agent = x_int[:, 3]
    g_emb = jnp.take(params["embed"], glyphs, axis=0)             # [n, hid]
    a_emb = jnp.take(params["embed_is_agent"], is_agent, axis=0)  # [n, 4]
    d = 1.0 / 10000.0
    xe = jnp.concatenate([jnp.sin(xpos * d), jnp.cos(xpos * d)], axis=0).reshape(-1, 2)
    ye = jnp.concatenate([jnp.sin(ypos * d), jnp.cos(ypos * d)], axis=0).reshape(-1, 2)
    h = jnp.concatenate([g_emb, xe, ye, a_emb], axis=-1).astype(jnp.float32)

    # ---- dense raw adjacency A[dst, src], built on device (jit-compatible) ----
    a_raw = jnp.zeros((n, n), jnp.float32).at[edge_index[1], edge_index[0]].add(1.0)
    alive = jnp.ones((n,), jnp.float32)

    # ---- first GCN layer ----
    adj = _normalize_adj(a_raw, alive).astype(jnp.bfloat16)
    h = gcn_first(adj, h, params["first_w"], params["first_b"])

    # ---- pooled blocks: fused 5 x (ReLU, GCN) + TopKPooling score per kernel ----
    blocks = params["blocks"]
    for i, blk in enumerate(blocks):
        p = blk["topk_p"]
        p_unit = (p / jnp.sqrt(jnp.sum(p * p))).reshape(1, -1)
        h, scores = gcn_block(adj, h, blk["gcn_w"], blk["gcn_b"], p_unit)
        keep = _topk_keep_mask(scores, batch, alive, ratio)
        h = h * scores * keep[:, None]     # TopKPooling gate; dropped rows -> 0
        alive = keep
        if i + 1 < len(blocks):
            adj = _normalize_adj(a_raw, alive).astype(jnp.bfloat16)

    # ---- global_mean_pool over surviving nodes + final Linear (Pallas) ----
    onehot = (batch[None, :] == jnp.arange(num_graphs)[:, None]).astype(jnp.float32)
    masked = onehot * alive[None, :]
    counts = jnp.maximum(jnp.sum(masked, axis=1, keepdims=True), 1.0)
    pool = masked / counts
    return pool_linear(pool, h, params["final_w"], params["final_b"])


# --------------------------------- params ----------------------------------

def init_params(key, in_dim, out_dim, hid=16, num_layers=15):
    ks = iter(jax.random.split(key, 64))

    def nrm(shape, scale=0.1):
        return jax.random.normal(next(ks), shape, jnp.float32) * scale

    params = {
        "embed": nrm((in_dim, hid)),
        "embed_is_agent": nrm((2, 4)),
        "first_w": nrm((hid + 8, hid)),
        "first_b": nrm((hid,)),
        "blocks": [],
        "final_w": nrm((hid, out_dim)),
        "final_b": nrm((out_dim,)),
    }
    n_pool = int(num_layers / 5.0)
    for _ in range(n_pool):
        params["blocks"].append({
            "gcn_w": nrm((5, hid, hid)),   # stacked -> one VMEM load per block
            "gcn_b": nrm((5, hid)),
            "topk_p": nrm((hid,)),
        })
    return params


# ---------------------------------- demo ------------------------------------

if __name__ == "__main__":
    key = jax.random.PRNGKey(0)
    in_dim, out_dim, hid = 8, 4, 16
    k_param, k_x = jax.random.split(key)
    params = init_params(k_param, in_dim, out_dim, hid, num_layers=15)

    # two graphs with 18 and 14 nodes (total N = 32)
    sizes = [18, 14]
    n = sum(sizes)
    batch_np = np.concatenate([np.full(s, g, np.int32) for g, s in enumerate(sizes)])

    kx1, kx2, kx3, kx4 = jax.random.split(k_x, 4)
    x = jnp.stack(
        [
            jax.random.randint(kx1, (n,), 0, in_dim),   # glyph id
            jax.random.randint(kx2, (n,), 0, 16),       # xpos
            jax.random.randint(kx3, (n,), 0, 16),       # ypos
            jax.random.randint(kx4, (n,), 0, 2),        # is_agent
        ],
        axis=1,
    ).astype(jnp.int32)

    # undirected ring within each graph plus a few chords (deterministic)
    edges = []
    off = 0
    for s in sizes:
        for i in range(s):
            a, b = off + i, off + (i + 1) % s
            edges.append((a, b))
            edges.append((b, a))
        for i in range(0, s - 3, 4):
            a, b = off + i, off + i + 3
            edges.append((a, b))
            edges.append((b, a))
        off += s
    edge_index = jnp.asarray(np.asarray(edges, np.int32).T)  # [2, E] (sender, receiver)

    fwd = jax.jit(forward, static_argnums=(4,))
    out = fwd(params, x, edge_index, jnp.asarray(batch_np), len(sizes))
    out = jax.block_until_ready(out)
    assert out.shape == (len(sizes), out_dim)
    assert bool(jnp.all(jnp.isfinite(out)))
    print("KERNEL_OK")
</pallas_src>

<mosaic_0001>
module attributes {stable_mosaic.version = 11 : i64} {
  func.func @_gcn_first_kernel(%arg0: memref<32x32xbf16, #tpu.memory_space<vmem>>, %arg1: memref<32x24xbf16, #tpu.memory_space<vmem>>, %arg2: memref<24x16xbf16, #tpu.memory_space<vmem>>, %arg3: memref<1x16xf32, #tpu.memory_space<vmem>>, %arg4: memref<32x16xf32, #tpu.memory_space<vmem>>) attributes {dimension_semantics = [], scalar_prefetch = 0 : i64, scratch_operands = 0 : i64, tpu.core_type = #tpu.core_type<tc>} {
    %c0 = arith.constant 0 : index
    %c0_0 = arith.constant 0 : index
    %0 = vector.load %arg1[%c0, %c0_0] : memref<32x24xbf16, #tpu.memory_space<vmem>>, vector<32x24xbf16>
    %c0_1 = arith.constant 0 : index
    %c0_2 = arith.constant 0 : index
    %1 = vector.load %arg2[%c0_1, %c0_2] : memref<24x16xbf16, #tpu.memory_space<vmem>>, vector<24x16xbf16>
    %cst = arith.constant dense<0.000000e+00> : vector<32x16xf32>
    %2 = tpu.matmul %0, %1, %cst {dimension_numbers = #tpu.dot_dimension_numbers<[1], [0], [0], [1], [0, 0, 1, 1], [], []>} : vector<32x24xbf16>, vector<24x16xbf16>, vector<32x16xf32> -> vector<32x16xf32>
    %c0_3 = arith.constant 0 : index
    %c0_4 = arith.constant 0 : index
    %3 = vector.load %arg0[%c0_3, %c0_4] : memref<32x32xbf16, #tpu.memory_space<vmem>>, vector<32x32xbf16>
    %4 = arith.truncf %2 : vector<32x16xf32> to vector<32x16xbf16>
    %cst_5 = arith.constant dense<0.000000e+00> : vector<32x16xf32>
    %5 = tpu.matmul %3, %4, %cst_5 {dimension_numbers = #tpu.dot_dimension_numbers<[1], [0], [0], [1], [0, 0, 1, 1], [], []>} : vector<32x32xbf16>, vector<32x16xbf16>, vector<32x16xf32> -> vector<32x16xf32>
    %c0_6 = arith.constant 0 : index
    %c0_7 = arith.constant 0 : index
    %6 = vector.load %arg3[%c0_6, %c0_7] : memref<1x16xf32, #tpu.memory_space<vmem>>, vector<1x16xf32>
    %7 = vector.broadcast %6 : vector<1x16xf32> to vector<32x16xf32>
    %8 = arith.addf %5, %7 : vector<32x16xf32>
    %c0_8 = arith.constant 0 : index
    %c0_9 = arith.constant 0 : index
    %9 = vector.load %arg4[%c0_8, %c0_9] : memref<32x16xf32, #tpu.memory_space<vmem>>, vector<32x16xf32>
    tpu.vector_store %arg4[%c0_8, %c0_9], %8 {strides = array<i32>} : memref<32x16xf32, #tpu.memory_space<vmem>>, vector<32x16xf32>,
    return
  }
}

module attributes {stable_mosaic.version = 11 : i64} {
  func.func @_gcn_block_kernel(%arg0: memref<32x32xbf16, #tpu.memory_space<vmem>>, %arg1: memref<32x16xf32, #tpu.memory_space<vmem>>, %arg2: memref<5x16x16xbf16, #tpu.memory_space<vmem>>, %arg3: memref<5x1x16xf32, #tpu.memory_space<vmem>>, %arg4: memref<1x16xf32, #tpu.memory_space<vmem>>, %arg5: memref<32x16xf32, #tpu.memory_space<vmem>>, %arg6: memref<32x1xf32, #tpu.memory_space<vmem>>) attributes {dimension_semantics = [], scalar_prefetch = 0 : i64, scratch_operands = 0 : i64, tpu.core_type = #tpu.core_type<tc>} {
    %c0 = arith.constant 0 : index
    %c0_0 = arith.constant 0 : index
    %0 = vector.load %arg0[%c0, %c0_0] : memref<32x32xbf16, #tpu.memory_space<vmem>>, vector<32x32xbf16>
    %c0_1 = arith.constant 0 : index
    %c0_2 = arith.constant 0 : index
    %1 = vector.load %arg1[%c0_1, %c0_2] : memref<32x16xf32, #tpu.memory_space<vmem>>, vector<32x16xf32>
    %c0_i32 = arith.constant 0 : i32
    %cst = arith.constant 0.000000e+00 : f32
    %2 = vector.broadcast %cst : f32 to vector<32x16xf32>
    %3 = arith.maximumf %1, %2 : vector<32x16xf32>
    %4 = arith.truncf %3 : vector<32x16xf32> to vector<32x16xbf16>
    %5 = arith.index_cast %c0_i32 : i32 to index
    %c0_3 = arith.constant 0 : index
    %c0_4 = arith.constant 0 : index
    %6 = vector.load %arg2[%5, %c0_3, %c0_4] : memref<5x16x16xbf16, #tpu.memory_space<vmem>>, vector<1x16x16xbf16>
    %7 = vector.shape_cast %6 : vector<1x16x16xbf16> to vector<16x16xbf16>
    %cst_5 = arith.constant dense<0.000000e+00> : vector<32x16xf32>
    %8 = tpu.matmul %4, %7, %cst_5 {dimension_numbers = #tpu.dot_dimension_numbers<[1], [0], [0], [1], [0, 0, 1, 1], [], []>} : vector<32x16xbf16>, vector<16x16xbf16>, vector<32x16xf32> -> vector<32x16xf32>
    %9 = arith.truncf %8 : vector<32x16xf32> to vector<32x16xbf16>
    %cst_6 = arith.constant dense<0.000000e+00> : vector<32x16xf32>
    %10 = tpu.matmul %0, %9, %cst_6 {dimension_numbers = #tpu.dot_dimension_numbers<[1], [0], [0], [1], [0, 0, 1, 1], [], []>} : vector<32x32xbf16>, vector<32x16xbf16>, vector<32x16xf32> -> vector<32x16xf32>
    %11 = arith.index_cast %c0_i32 : i32 to index
    %c0_7 = arith.constant 0 : index
    %c0_8 = arith.constant 0 : index
    %12 = vector.load %arg3[%11, %c0_7, %c0_8] : memref<5x1x16xf32, #tpu.memory_space<vmem>>, vector<1x1x16xf32>
    %13 = vector.shape_cast %12 : vector<1x1x16xf32> to vector<1x16xf32>
    %14 = vector.broadcast %13 : vector<1x16xf32> to vector<32x16xf32>
    %15 = arith.addf %10, %14 : vector<32x16xf32>
    %c1_i32 = arith.constant 1 : i32
    %cst_9 = arith.constant 0.000000e+00 : f32
    %16 = vector.broadcast %cst_9 : f32 to vector<32x16xf32>
    %17 = arith.maximumf %15, %16 : vector<32x16xf32>
    %18 = arith.truncf %17 : vector<32x16xf32> to vector<32x16xbf16>
    %19 = arith.index_cast %c1_i32 : i32 to index
    %c0_10 = arith.constant 0 : index
    %c0_11 = arith.constant 0 : index
    %20 = vector.load %arg2[%19, %c0_10, %c0_11] : memref<5x16x16xbf16, #tpu.memory_space<vmem>>, vector<1x16x16xbf16>
    %21 = vector.shape_cast %20 : vector<1x16x16xbf16> to vector<16x16xbf16>
    %cst_12 = arith.constant dense<0.000000e+00> : vector<32x16xf32>
    %22 = tpu.matmul %18, %21, %cst_12 {dimension_numbers = #tpu.dot_dimension_numbers<[1], [0], [0], [1], [0, 0, 1, 1], [], []>} : vector<32x16xbf16>, vector<16x16xbf16>, vector<32x16xf32> -> vector<32x16xf32>
    %23 = arith.truncf %22 : vector<32x16xf32> to vector<32x16xbf16>
    %cst_13 = arith.constant dense<0.000000e+00> : vector<32x16xf32>
    %24 = tpu.matmul %0, %23, %cst_13 {dimension_numbers = #tpu.dot_dimension_numbers<[1], [0], [0], [1], [0, 0, 1, 1], [], []>} : vector<32x32xbf16>, vector<32x16xbf16>, vector<32x16xf32> -> vector<32x16xf32>
    %25 = arith.index_cast %c1_i32 : i32 to index
    %c0_14 = arith.constant 0 : index
    %c0_15 = arith.constant 0 : index
    %26 = vector.load %arg3[%25, %c0_14, %c0_15] : memref<5x1x16xf32, #tpu.memory_space<vmem>>, vector<1x1x16xf32>
    %27 = vector.shape_cast %26 : vector<1x1x16xf32> to vector<1x16xf32>
    %28 = vector.broadcast %27 : vector<1x16xf32> to vector<32x16xf32>
    %29 = arith.addf %24, %28 : vector<32x16xf32>
    %c2_i32 = arith.constant 2 : i32
    %cst_16 = arith.constant 0.000000e+00 : f32
    %30 = vector.broadcast %cst_16 : f32 to vector<32x16xf32>
    %31 = arith.maximumf %29, %30 : vector<32x16xf32>
    %32 = arith.truncf %31 : vector<32x16xf32> to vector<32x16xbf16>
    %33 = arith.index_cast %c2_i32 : i32 to index
    %c0_17 = arith.constant 0 : index
    %c0_18 = arith.constant 0 : index
    %34 = vector.load %arg2[%33, %c0_17, %c0_18] : memref<5x16x16xbf16, #tpu.memory_space<vmem>>, vector<1x16x16xbf16>
    %35 = vector.shape_cast %34 : vector<1x16x16xbf16> to vector<16x16xbf16>
    %cst_19 = arith.constant dense<0.000000e+00> : vector<32x16xf32>
    %36 = tpu.matmul %32, %35, %cst_19 {dimension_numbers = #tpu.dot_dimension_numbers<[1], [0], [0], [1], [0, 0, 1, 1], [], []>} : vector<32x16xbf16>, vector<16x16xbf16>, vector<32x16xf32> -> vector<32x16xf32>
    %37 = arith.truncf %36 : vector<32x16xf32> to vector<32x16xbf16>
    %cst_20 = arith.constant dense<0.000000e+00> : vector<32x16xf32>
    %38 = tpu.matmul %0, %37, %cst_20 {dimension_numbers = #tpu.dot_dimension_numbers<[1], [0], [0], [1], [0, 0, 1, 1], [], []>} : vector<32x32xbf16>, vector<32x16xbf16>, vector<32x16xf32> -> vector<32x16xf32>
    %39 = arith.index_cast %c2_i32 : i32 to index
    %c0_21 = arith.constant 0 : index
    %c0_22 = arith.constant 0 : index
    %40 = vector.load %arg3[%39, %c0_21, %c0_22] : memref<5x1x16xf32, #tpu.memory_space<vmem>>, vector<1x1x16xf32>
    %41 = vector.shape_cast %40 : vector<1x1x16xf32> to vector<1x16xf32>
    %42 = vector.broadcast %41 : vector<1x16xf32> to vector<32x16xf32>
    %43 = arith.addf %38, %42 : vector<32x16xf32>
    %c3_i32 = arith.constant 3 : i32
    %cst_23 = arith.constant 0.000000e+00 : f32
    %44 = vector.broadcast %cst_23 : f32 to vector<32x16xf32>
    %45 = arith.maximumf %43, %44 : vector<32x16xf32>
    %46 = arith.truncf %45 : vector<32x16xf32> to vector<32x16xbf16>
    %47 = arith.index_cast %c3_i32 : i32 to index
    %c0_24 = arith.constant 0 : index
    %c0_25 = arith.constant 0 : index
    %48 = vector.load %arg2[%47, %c0_24, %c0_25] : memref<5x16x16xbf16, #tpu.memory_space<vmem>>, vector<1x16x16xbf16>
    %49 = vector.shape_cast %48 : vector<1x16x16xbf16> to vector<16x16xbf16>
    %cst_26 = arith.constant dense<0.000000e+00> : vector<32x16xf32>
    %50 = tpu.matmul %46, %49, %cst_26 {dimension_numbers = #tpu.dot_dimension_numbers<[1], [0], [0], [1], [0, 0, 1, 1], [], []>} : vector<32x16xbf16>, vector<16x16xbf16>, vector<32x16xf32> -> vector<32x16xf32>
    %51 = arith.truncf %50 : vector<32x16xf32> to vector<32x16xbf16>
    %cst_27 = arith.constant dense<0.000000e+00> : vector<32x16xf32>
    %52 = tpu.matmul %0, %51, %cst_27 {dimension_numbers = #tpu.dot_dimension_numbers<[1], [0], [0], [1], [0, 0, 1, 1], [], []>} : vector<32x32xbf16>, vector<32x16xbf16>, vector<32x16xf32> -> vector<32x16xf32>
    %53 = arith.index_cast %c3_i32 : i32 to index
    %c0_28 = arith.constant 0 : index
    %c0_29 = arith.constant 0 : index
    %54 = vector.load %arg3[%53, %c0_28, %c0_29] : memref<5x1x16xf32, #tpu.memory_space<vmem>>, vector<1x1x16xf32>
    %55 = vector.shape_cast %54 : vector<1x1x16xf32> to vector<1x16xf32>
    %56 = vector.broadcast %55 : vector<1x16xf32> to vector<32x16xf32>
    %57 = arith.addf %52, %56 : vector<32x16xf32>
    %c4_i32 = arith.constant 4 : i32
    %cst_30 = arith.constant 0.000000e+00 : f32
    %58 = vector.broadcast %cst_30 : f32 to vector<32x16xf32>
    %59 = arith.maximumf %57, %58 : vector<32x16xf32>
    %60 = arith.truncf %59 : vector<32x16xf32> to vector<32x16xbf16>
    %61 = arith.index_cast %c4_i32 : i32 to index
    %c0_31 = arith.constant 0 : index
    %c0_32 = arith.constant 0 : index
    %62 = vector.load %arg2[%61, %c0_31, %c0_32] : memref<5x16x16xbf16, #tpu.memory_space<vmem>>, vector<1x16x16xbf16>
    %63 = vector.shape_cast %62 : vector<1x16x16xbf16> to vector<16x16xbf16>
    %cst_33 = arith.constant dense<0.000000e+00> : vector<32x16xf32>
    %64 = tpu.matmul %60, %63, %cst_33 {dimension_numbers = #tpu.dot_dimension_numbers<[1], [0], [0], [1], [0, 0, 1, 1], [], []>} : vector<32x16xbf16>, vector<16x16xbf16>, vector<32x16xf32> -> vector<32x16xf32>
    %65 = arith.truncf %64 : vector<32x16xf32> to vector<32x16xbf16>
    %cst_34 = arith.constant dense<0.000000e+00> : vector<32x16xf32>
    %66 = tpu.matmul %0, %65, %cst_34 {dimension_numbers = #tpu.dot_dimension_numbers<[1], [0], [0], [1], [0, 0, 1, 1], [], []>} : vector<32x32xbf16>, vector<32x16xbf16>, vector<32x16xf32> -> vector<32x16xf32>
    %67 = arith.index_cast %c4_i32 : i32 to index
    %c0_35 = arith.constant 0 : index
    %c0_36 = arith.constant 0 : index
    %68 = vector.load %arg3[%67, %c0_35, %c0_36] : memref<5x1x16xf32, #tpu.memory_space<vmem>>, vector<1x1x16xf32>
    %69 = vector.shape_cast %68 : vector<1x1x16xf32> to vector<1x16xf32>
    %70 = vector.broadcast %69 : vector<1x16xf32> to vector<32x16xf32>
    %71 = arith.addf %66, %70 : vector<32x16xf32>
    %c5_i32 = arith.constant 5 : i32
    %c0_37 = arith.constant 0 : index
    %c0_38 = arith.constant 0 : index
    %72 = vector.load %arg5[%c0_37, %c0_38] : memref<32x16xf32, #tpu.memory_space<vmem>>, vector<32x16xf32>
    tpu.vector_store %arg5[%c0_37, %c0_38], %71 {strides = array<i32>} : memref<32x16xf32, #tpu.memory_space<vmem>>, vector<32x16xf32>,
    %c0_39 = arith.constant 0 : index
    %c0_40 = arith.constant 0 : index
    %73 = vector.load %arg4[%c0_39, %c0_40] : memref<1x16xf32, #tpu.memory_space<vmem>>, vector<1x16xf32>
    %74 = vector.broadcast %73 : vector<1x16xf32> to vector<32x16xf32>
    %75 = arith.mulf %71, %74 : vector<32x16xf32>
    %cst_41 = arith.constant dense<0.000000e+00> : vector<32xf32>
    %76 = vector.multi_reduction <add>, %75, %cst_41 [1] : vector<32x16xf32> to vector<32xf32>
    %77 = vector.shape_cast %76 : vector<32xf32> to vector<32x1xf32>
    %78 = math.tanh %77 : vector<32x1xf32>
    %c0_42 = arith.constant 0 : index
    %c0_43 = arith.constant 0 : index
    %79 = vector.load %arg6[%c0_42, %c0_43] : memref<32x1xf32, #tpu.memory_space<vmem>>, vector<32x1xf32>
    tpu.vector_store %arg6[%c0_42, %c0_43], %78 {strides = array<i32>} : memref<32x1xf32, #tpu.memory_space<vmem>>, vector<32x1xf32>,
    return
  }
}

module attributes {stable_mosaic.version = 11 : i64} {
  func.func @_pool_linear_kernel(%arg0: memref<2x32xbf16, #tpu.memory_space<vmem>>, %arg1: memref<32x16xbf16, #tpu.memory_space<vmem>>, %arg2: memref<16x4xbf16, #tpu.memory_space<vmem>>, %arg3: memref<1x4xf32, #tpu.memory_space<vmem>>, %arg4: memref<2x4xf32, #tpu.memory_space<vmem>>) attributes {dimension_semantics = [], scalar_prefetch = 0 : i64, scratch_operands = 0 : i64, tpu.core_type = #tpu.core_type<tc>} {
    %c0 = arith.constant 0 : index
    %c0_0 = arith.constant 0 : index
    %0 = vector.load %arg0[%c0, %c0_0] : memref<2x32xbf16, #tpu.memory_space<vmem>>, vector<2x32xbf16>
    %c0_1 = arith.constant 0 : index
    %c0_2 = arith.constant 0 : index
    %1 = vector.load %arg1[%c0_1, %c0_2] : memref<32x16xbf16, #tpu.memory_space<vmem>>, vector<32x16xbf16>
    %cst = arith.constant dense<0.000000e+00> : vector<2x16xf32>
    %2 = tpu.matmul %0, %1, %cst {dimension_numbers = #tpu.dot_dimension_numbers<[1], [0], [0], [1], [0, 0, 1, 1], [], []>} : vector<2x32xbf16>, vector<32x16xbf16>, vector<2x16xf32> -> vector<2x16xf32>
    %3 = arith.truncf %2 : vector<2x16xf32> to vector<2x16xbf16>
    %c0_3 = arith.constant 0 : index
    %c0_4 = arith.constant 0 : index
    %4 = vector.load %arg2[%c0_3, %c0_4] : memref<16x4xbf16, #tpu.memory_space<vmem>>, vector<16x4xbf16>
    %cst_5 = arith.constant dense<0.000000e+00> : vector<2x4xf32>
    %5 = tpu.matmul %3, %4, %cst_5 {dimension_numbers = #tpu.dot_dimension_numbers<[1], [0], [0], [1], [0, 0, 1, 1], [], []>} : vector<2x16xbf16>, vector<16x4xbf16>, vector<2x4xf32> -> vector<2x4xf32>
    %c0_6 = arith.constant 0 : index
    %c0_7 = arith.constant 0 : index
    %6 = vector.load %arg3[%c0_6, %c0_7] : memref<1x4xf32, #tpu.memory_space<vmem>>, vector<1x4xf32>
    %7 = vector.broadcast %6 : vector<1x4xf32> to vector<2x4xf32>
    %8 = arith.addf %5, %7 : vector<2x4xf32>
    %c0_8 = arith.constant 0 : index
    %c0_9 = arith.constant 0 : index
    %9 = vector.load %arg4[%c0_8, %c0_9] : memref<2x4xf32, #tpu.memory_space<vmem>>, vector<2x4xf32>
    tpu.vector_store %arg4[%c0_8, %c0_9], %8 {strides = array<i32>} : memref<2x4xf32, #tpu.memory_space<vmem>>, vector<2x4xf32>,
    return
  }
}

</mosaic_0001>

<llo_original>
// kernel: forward.5
$region0: #{forward.5}
  #allocation0 [shape = 'u32[]', space=smem, size = 0x4, offset = 0x4, fixed_abs, tag = 'smem constant byte address 0x4 - core index']
  #allocation1 [shape = 'u32[144,128]{1,0:T(1,128)}', space=vmem, size = 0x12000, scoped, tag = 'internal scratch']
  %s0 = inlined_call_operand.vmem [shape: bf16[32,32], index: 0, kind: input, shape index: {}]
  %s1 = inlined_call_operand.vmem [shape: bf16[32,24], index: 1, kind: input, shape index: {}]
  %s2 = inlined_call_operand.vmem [shape: bf16[24,16], index: 2, kind: input, shape index: {}]
  %s3 = inlined_call_operand.vmem [shape: f32[1,16], index: 3, kind: input, shape index: {}]
  %s4 = inlined_call_operand.vmem [shape: f32[32,16], index: 4, kind: output, shape index: {}]
  %s5 = sld [smem:[#allocation0]]
  $region26: #{forward.5} parent=0
    _
  %s7 = ssub.s32 1, %s5
  %s8 = scalar_select 0, %s7, %s5
  // Predicated region
  $region2: #{forward.5} parent=0 // pred_check
    _
  $region3: #{forward.5} parent=0 // pred_check_branch
    %10 = sbr.rel (0) target = $region5
  $region4: #{forward.5} parent=0 // pred_region
    _
  $region5: #{forward.5} parent=0 // pred_fallthru
    _
  // Predicated region
  $region6: #{forward.5} parent=0 // pred_check
    _
  $region7: #{forward.5} parent=0 // pred_check_branch
    %12 = sbr.rel (0) target = $region9
  $region8: #{forward.5} parent=0 // pred_region
    _
  $region9: #{forward.5} parent=0 // pred_fallthru
    _
  // Predicated region
  $region10: #{forward.5} parent=0 // pred_check
    _
  $region11: #{forward.5} parent=0 // pred_check_branch
    %14 = sbr.rel (0) target = $region13
  $region12: #{forward.5} parent=0 // pred_region
    _
  $region13: #{forward.5} parent=0 // pred_fallthru
    _
  // Predicated region
  $region14: #{forward.5} parent=0 // pred_check
    _
  $region15: #{forward.5} parent=0 // pred_check_branch
    %16 = sbr.rel (0) target = $region17
  $region16: #{forward.5} parent=0 // pred_region
    _
  $region17: #{forward.5} parent=0 // pred_fallthru
    _
  %v18 = vld [vmem:[%s1] sm:$0xf]
  %v19 = vld [vmem:[%s1 + $0x4] sm:$0xf]
  %v20 = vld [vmem:[%s1 + $0x8] sm:$0xf]
  %v21 = vld [vmem:[%s1 + $0xc] sm:$0xf]
  %v22 = vld [vmem:[%s2] sm:$0xf]
  %v23 = vld [vmem:[%s2 + $0x4] sm:$0xf]
  %v24 = vld [vmem:[%s2 + $0x8] sm:$0xf]
  %v29 = vunpack.c.l.b16 %v18
  %v30 = vunpack.c.l.b16 %v19
  %v31 = vunpack.c.l.b16 %v20
  %v32 = vunpack.c.l.b16 %v21
  %v33 = vpack.c.b16 %v30, %v29
  %v34 = vpack.c.b16 %v32, %v31
  %v38 = vunpack.c.l.b16 %v22
  %v39 = vunpack.c.l.b16 %v23
  %v40 = vunpack.c.l.b16 %v24
  %v41 = vpack.c.b16 %v39, %v38
  %v42 = vpack.c.b16 %v40, %v40
  %vm44 = vcmask 195584
  %v46 = vsel %vm44, %v33, 0
  %v49 = vsel %vm44, %v34, 0
  %vm51 = vcmask 1043456
  %v53 = vsel %vm51, %v42, 0
  %55 = vmatprep.subr.bf16.mxu0 0
  %56 = vmatpush1.bf16.msra.mxu0 %v41
  %57 = vmatprep.subr.bf16.mxu0 0
  %58 = vmatpush1.bf16.msra.mxu0 %v53
  %59 = vmatprep.subr.bf16.mxu0 0
  %60 = vmatpush1.bf16.msra.mxu0 0
  %61 = vmatprep.subr.bf16.mxu0 0
  %62 = vmatpush1.bf16.msra.mxu0 0
  %63 = vmatprep.subr.bf16.mxu0 0
  %64 = vmatpush1.bf16.msra.mxu0 0
  %65 = vmatprep.subr.bf16.mxu0 0
  %66 = vmatpush1.bf16.msra.mxu0 0
  %67 = vmatprep.subr.bf16.mxu0 0
  %68 = vmatpush1.bf16.msra.mxu0 0
  %69 = vmatprep.subr.bf16.mxu0 0
  %70 = vmatpush1.bf16.msra.mxu0 0
  %71 = vmatprep.subr.bf16.mxu0 0
  %72 = vmatpush1.bf16.msra.mxu0 0
  %73 = vmatprep.subr.bf16.mxu0 0
  %74 = vmatpush1.bf16.msra.mxu0 0
  %75 = vmatprep.subr.bf16.mxu0 0
  %76 = vmatpush1.bf16.msra.mxu0 0
  %77 = vmatprep.subr.bf16.mxu0 0
  %78 = vmatpush1.bf16.msra.mxu0 0
  %79 = vmatprep.subr.bf16.mxu0 0
  %80 = vmatpush1.bf16.msra.mxu0 0
  %81 = vmatprep.subr.bf16.mxu0 0
  %82 = vmatpush1.bf16.msra.mxu0 0
  %83 = vmatprep.subr.bf16.mxu0 0
  %84 = vmatpush1.bf16.msra.mxu0 0
  %85 = vmatprep.subr.bf16.mxu0 0
  %86 = vmatpush1.bf16.msra.mxu0 0
  %87 = vmatprep.mubr.bf16.mxu0 0
  %88 = vmatmul.mubr.bf16.gmra.mrb[0].mxu0 %v46
  %v89 = vpop.f32.mrb[0].mxu0
  %v90 = vadd.f32 0.0, %v89
  %v91 = vpop.f32.mrb[0].mxu0
  %v92 = vpop.f32.mrb[0].mxu0
  %v93 = vadd.f32 0.0, %v92
  %v94 = vpop.f32.mrb[0].mxu0
  %95 = vmatprep.mubr.bf16.mxu0 0
  %96 = vmatmul.mubr.bf16.gmra.mrb[0].mxu0 %v49
  %v97 = vpop.f32.mrb[0].mxu0
  %v98 = vadd.f32 0.0, %v97
  %v99 = vpop.f32.mrb[0].mxu0
  %v100 = vpop.f32.mrb[0].mxu0
  %v101 = vadd.f32 0.0, %v100
  %v102 = vpop.f32.mrb[0].mxu0
  %103 = vdwg.mxu0
  %v104 = vld [vmem:[%s0] sm:$0xf]
  %v105 = vld [vmem:[%s0 + $0x4] sm:$0xf]
  %v106 = vld [vmem:[%s0 + $0x8] sm:$0xf]
  %v107 = vld [vmem:[%s0 + $0xc] sm:$0xf]
  %v108 = vpack.c.bf16 %v93, %v90
  %v109 = vpack.c.bf16 %v101, %v98
  %v110 = vld [vmem:[%s3] sm:$0x1]
  %v112 = vlaneseq
  %v113 = vshrl.u32 %v112, 7
  %v114 = vsub.s32 0, %v113
  %v115 = vrot.slane %v110, %v114
  %v121 = vunpack.c.l.b16 %v104
  %v122 = vunpack.c.l.b16 %v105
  %v123 = vunpack.c.l.b16 %v106
  %v124 = vunpack.c.l.b16 %v107
  %v125 = vpack.c.b16 %v122, %v121
  %v126 = vpack.c.b16 %v124, %v123
  %vm127 = vcmask 261120
  %v129 = vsel %vm127, %v125, 0
  %v132 = vsel %vm127, %v126, 0
  %134 = vmatprep.subr.bf16.mxu0 0
  %135 = vmatpush1.bf16.msra.mxu0 %v108
  %136 = vmatprep.subr.bf16.mxu0 0
  %137 = vmatpush1.bf16.msra.mxu0 %v109
  %138 = vmatprep.subr.bf16.mxu0 0
  %139 = vmatpush1.bf16.msra.mxu0 0
  %140 = vmatprep.subr.bf16.mxu0 0
  %141 = vmatpush1.bf16.msra.mxu0 0
  %142 = vmatprep.subr.bf16.mxu0 0
  %143 = vmatpush1.bf16.msra.mxu0 0
  %144 = vmatprep.subr.bf16.mxu0 0
  %145 = vmatpush1.bf16.msra.mxu0 0
  %146 = vmatprep.subr.bf16.mxu0 0
  %147 = vmatpush1.bf16.msra.mxu0 0
  %148 = vmatprep.subr.bf16.mxu0 0
  %149 = vmatpush1.bf16.msra.mxu0 0
  %150 = vmatprep.subr.bf16.mxu0 0
  %151 = vmatpush1.bf16.msra.mxu0 0
  %152 = vmatprep.subr.bf16.mxu0 0
  %153 = vmatpush1.bf16.msra.mxu0 0
  %154 = vmatprep.subr.bf16.mxu0 0
  %155 = vmatpush1.bf16.msra.mxu0 0
  %156 = vmatprep.subr.bf16.mxu0 0
  %157 = vmatpush1.bf16.msra.mxu0 0
  %158 = vmatprep.subr.bf16.mxu0 0
  %159 = vmatpush1.bf16.msra.mxu0 0
  %160 = vmatprep.subr.bf16.mxu0 0
  %161 = vmatpush1.bf16.msra.mxu0 0
  %162 = vmatprep.subr.bf16.mxu0 0
  %163 = vmatpush1.bf16.msra.mxu0 0
  %164 = vmatprep.subr.bf16.mxu0 0
  %165 = vmatpush1.bf16.msra.mxu0 0
  %166 = vmatprep.mubr.bf16.mxu0 0
  %167 = vmatmul.mubr.bf16.gmra.mrb[0].mxu0 %v129
  %v168 = vpop.f32.mrb[0].mxu0
  %v169 = vadd.f32 %v115, %v168
  %v170 = vpop.f32.mrb[0].mxu0
  %v171 = vpop.f32.mrb[0].mxu0
  %v172 = vadd.f32 %v115, %v171
  %v173 = vpop.f32.mrb[0].mxu0
  %174 = vmatprep.mubr.bf16.mxu0 0
  %175 = vmatmul.mubr.bf16.gmra.mrb[0].mxu0 %v132
  %v176 = vpop.f32.mrb[0].mxu0
  %v177 = vadd.f32 %v115, %v176
  %v178 = vpop.f32.mrb[0].mxu0
  %v179 = vpop.f32.mrb[0].mxu0
  %v180 = vadd.f32 %v115, %v179
  %v181 = vpop.f32.mrb[0].mxu0
  %182 = vdwg.mxu0
  %vm183 = vcmask 130048
  %184 = vst.msk [vmem:[%s4] sm:$0xff] %vm183, %v169
  %185 = vst.msk [vmem:[%s4 + $0x8] sm:$0xff] %vm183, %v172
  %186 = vst.msk [vmem:[%s4 + $0x10] sm:$0xff] %vm183, %v177
  %187 = vst.msk [vmem:[%s4 + $0x18] sm:$0xff] %vm183, %v180
  // Predicated region
  $region18: #{forward.5} parent=0 // pred_check
    _
  $region19: #{forward.5} parent=0 // pred_check_branch
    %189 = sbr.rel (0) target = $region21
  $region20: #{forward.5} parent=0 // pred_region
    _
  $region21: #{forward.5} parent=0 // pred_fallthru
    _
  // Predicated region
  $region22: #{forward.5} parent=0 // pred_check
    _
  $region23: #{forward.5} parent=0 // pred_check_branch
    %191 = sbr.rel (0) target = $region25
  $region24: #{forward.5} parent=0 // pred_region
    _
  $region25: #{forward.5} parent=0 // pred_fallthru
    _

// kernel: forward.6
$region0: #{forward.6}
  #allocation0 [shape = 'u32[]', space=smem, size = 0x4, offset = 0x4, fixed_abs, tag = 'smem constant byte address 0x4 - core index']
  #allocation1 [shape = 'u32[144,128]{1,0:T(1,128)}', space=vmem, size = 0x12000, scoped, tag = 'internal scratch']
  %s0 = inlined_call_operand.vmem [shape: bf16[32,32], index: 0, kind: input, shape index: {}]
  %s1 = inlined_call_operand.vmem [shape: f32[32,16], index: 1, kind: input, shape index: {}]
  %s2 = inlined_call_operand.vmem [shape: bf16[5,16,16], index: 2, kind: input, shape index: {}]
  %s3 = inlined_call_operand.vmem [shape: f32[5,1,16], index: 3, kind: input, shape index: {}]
  %s4 = inlined_call_operand.vmem [shape: f32[1,16], index: 4, kind: input, shape index: {}]
  %s5 = inlined_call_operand.vmem [shape: f32[32,16], index: 5, kind: output, shape index: {0}]
  %s6 = inlined_call_operand.vmem [shape: f32[32,1], index: 6, kind: output, shape index: {1}]
  %7 = xla_tuple %s5, %s6
  %s8 = sld [smem:[#allocation0]]
  $region38: #{forward.6} parent=0
    _
  %s10 = ssub.s32 1, %s8
  %s11 = scalar_select 0, %s10, %s8
  // Predicated region
  $region2: #{forward.6} parent=0 // pred_check
    _
  $region3: #{forward.6} parent=0 // pred_check_branch
    %13 = sbr.rel (0) target = $region5
  $region4: #{forward.6} parent=0 // pred_region
    _
  $region5: #{forward.6} parent=0 // pred_fallthru
    _
  // Predicated region
  $region6: #{forward.6} parent=0 // pred_check
    _
  $region7: #{forward.6} parent=0 // pred_check_branch
    %15 = sbr.rel (0) target = $region9
  $region8: #{forward.6} parent=0 // pred_region
    _
  $region9: #{forward.6} parent=0 // pred_fallthru
    _
  // Predicated region
  $region10: #{forward.6} parent=0 // pred_check
    _
  $region11: #{forward.6} parent=0 // pred_check_branch
    %17 = sbr.rel (0) target = $region13
  $region12: #{forward.6} parent=0 // pred_region
    _
  $region13: #{forward.6} parent=0 // pred_fallthru
    _
  // Predicated region
  $region14: #{forward.6} parent=0 // pred_check
    _
  $region15: #{forward.6} parent=0 // pred_check_branch
    %19 = sbr.rel (0) target = $region17
  $region16: #{forward.6} parent=0 // pred_region
    _
  $region17: #{forward.6} parent=0 // pred_fallthru
    _
  // Predicated region
  $region18: #{forward.6} parent=0 // pred_check
    _
  $region19: #{forward.6} parent=0 // pred_check_branch
    %21 = sbr.rel (0) target = $region21
  $region20: #{forward.6} parent=0 // pred_region
    _
  $region21: #{forward.6} parent=0 // pred_fallthru
    _
  %v23 = vld [vmem:[%s0] sm:$0xf]
  %v24 = vld [vmem:[%s0 + $0x4] sm:$0xf]
  %v25 = vld [vmem:[%s0 + $0x8] sm:$0xf]
  %v26 = vld [vmem:[%s0 + $0xc] sm:$0xf]
  %v27 = vld [vmem:[%s1] sm:$0xff]
  %v28 = vld [vmem:[%s1 + $0x8] sm:$0xff]
  %v29 = vld [vmem:[%s1 + $0x10] sm:$0xff]
  %v30 = vld [vmem:[%s1 + $0x18] sm:$0xff]
  %v31 = vmax.f32 %v27, 0.0
  %v32 = vmax.f32 %v28, 0.0
  %v33 = vmax.f32 %v29, 0.0
  %v34 = vmax.f32 %v30, 0.0
  %v35 = vpack.c.bf16 %v32, %v31
  %v36 = vpack.c.bf16 %v34, %v33
  %v37 = vld [vmem:[%s2] sm:$0xf]
  %v38 = vld [vmem:[%s2 + $0x4] sm:$0xf]
  %v41 = vunpack.c.l.b16 %v37
  %v42 = vunpack.c.l.b16 %v38
  %v43 = vpack.c.b16 %v42, %v41
  %vm45 = vcmask 130048
  %v47 = vsel %vm45, %v35, 0
  %v50 = vsel %vm45, %v36, 0
  %52 = vmatprep.subr.bf16.mxu0 0
  %53 = vmatpush1.bf16.msra.mxu0 %v43
  %54 = vmatprep.subr.bf16.mxu0 0
  %55 = vmatpush1.bf16.msra.mxu0 0
  %56 = vmatprep.subr.bf16.mxu0 0
  %57 = vmatpush1.bf16.msra.mxu0 0
  %58 = vmatprep.subr.bf16.mxu0 0
  %59 = vmatpush1.bf16.msra.mxu0 0
  %60 = vmatprep.subr.bf16.mxu0 0
  %61 = vmatpush1.bf16.msra.mxu0 0
  %62 = vmatprep.subr.bf16.mxu0 0
  %63 = vmatpush1.bf16.msra.mxu0 0
  %64 = vmatprep.subr.bf16.mxu0 0
  %65 = vmatpush1.bf16.msra.mxu0 0
  %66 = vmatprep.subr.bf16.mxu0 0
  %67 = vmatpush1.bf16.msra.mxu0 0
  %68 = vmatprep.subr.bf16.mxu0 0
  %69 = vmatpush1.bf16.msra.mxu0 0
  %70 = vmatprep.subr.bf16.mxu0 0
  %71 = vmatpush1.bf16.msra.mxu0 0
  %72 = vmatprep.subr.bf16.mxu0 0
  %73 = vmatpush1.bf16.msra.mxu0 0
  %74 = vmatprep.subr.bf16.mxu0 0
  %75 = vmatpush1.bf16.msra.mxu0 0
  %76 = vmatprep.subr.bf16.mxu0 0
  %77 = vmatpush1.bf16.msra.mxu0 0
  %78 = vmatprep.subr.bf16.mxu0 0
  %79 = vmatpush1.bf16.msra.mxu0 0
  %80 = vmatprep.subr.bf16.mxu0 0
  %81 = vmatpush1.bf16.msra.mxu0 0
  %82 = vmatprep.subr.bf16.mxu0 0
  %83 = vmatpush1.bf16.msra.mxu0 0
  %84 = vmatprep.mubr.bf16.mxu0 0
  %85 = vmatmul.mubr.bf16.gmra.mrb[0].mxu0 %v47
  %v86 = vpop.f32.mrb[0].mxu0
  %v87 = vadd.f32 0.0, %v86
  %v88 = vpop.f32.mrb[0].mxu0
  %v89 = vpop.f32.mrb[0].mxu0
  %v90 = vadd.f32 0.0, %v89
  %v91 = vpop.f32.mrb[0].mxu0
  %92 = vmatprep.mubr.bf16.mxu0 0
  %93 = vmatmul.mubr.bf16.gmra.mrb[0].mxu0 %v50
  %v94 = vpop.f32.mrb[0].mxu0
  %v95 = vadd.f32 0.0, %v94
  %v96 = vpop.f32.mrb[0].mxu0
  %v97 = vpop.f32.mrb[0].mxu0
  %v98 = vadd.f32 0.0, %v97
  %v99 = vpop.f32.mrb[0].mxu0
  %100 = vdwg.mxu0
  %v101 = vpack.c.bf16 %v90, %v87
  %v102 = vpack.c.bf16 %v98, %v95
  %v103 = vld [vmem:[%s3] sm:$0x1]
  %v105 = vlaneseq
  %v106 = vshrl.u32 %v105, 7
  %v107 = vsub.s32 0, %v106
  %v108 = vrot.slane %v103, %v107
  %v114 = vunpack.c.l.b16 %v23
  %v115 = vunpack.c.l.b16 %v24
  %v116 = vunpack.c.l.b16 %v25
  %v117 = vunpack.c.l.b16 %v26
  %v118 = vpack.c.b16 %v115, %v114
  %v119 = vpack.c.b16 %v117, %v116
  %vm120 = vcmask 261120
  %v122 = vsel %vm120, %v118, 0
  %v125 = vsel %vm120, %v119, 0
  %127 = vmatprep.subr.bf16.mxu0 0
  %128 = vmatpush1.bf16.msra.mxu0 %v101
  %129 = vmatprep.subr.bf16.mxu0 0
  %130 = vmatpush1.bf16.msra.mxu0 %v102
  %131 = vmatprep.subr.bf16.mxu0 0
  %132 = vmatpush1.bf16.msra.mxu0 0
  %133 = vmatprep.subr.bf16.mxu0 0
  %134 = vmatpush1.bf16.msra.mxu0 0
  %135 = vmatprep.subr.bf16.mxu0 0
  %136 = vmatpush1.bf16.msra.mxu0 0
  %137 = vmatprep.subr.bf16.mxu0 0
  %138 = vmatpush1.bf16.msra.mxu0 0
  %139 = vmatprep.subr.bf16.mxu0 0
  %140 = vmatpush1.bf16.msra.mxu0 0
  %141 = vmatprep.subr.bf16.mxu0 0
  %142 = vmatpush1.bf16.msra.mxu0 0
  %143 = vmatprep.subr.bf16.mxu0 0
  %144 = vmatpush1.bf16.msra.mxu0 0
  %145 = vmatprep.subr.bf16.mxu0 0
  %146 = vmatpush1.bf16.msra.mxu0 0
  %147 = vmatprep.subr.bf16.mxu0 0
  %148 = vmatpush1.bf16.msra.mxu0 0
  %149 = vmatprep.subr.bf16.mxu0 0
  %150 = vmatpush1.bf16.msra.mxu0 0
  %151 = vmatprep.subr.bf16.mxu0 0
  %152 = vmatpush1.bf16.msra.mxu0 0
  %153 = vmatprep.subr.bf16.mxu0 0
  %154 = vmatpush1.bf16.msra.mxu0 0
  %155 = vmatprep.subr.bf16.mxu0 0
  %156 = vmatpush1.bf16.msra.mxu0 0
  %157 = vmatprep.subr.bf16.mxu0 0
  %158 = vmatpush1.bf16.msra.mxu0 0
  %159 = vmatprep.mubr.bf16.mxu0 0
  %160 = vmatmul.mubr.bf16.gmra.mrb[0].mxu0 %v122
  %v161 = vpop.f32.mrb[0].mxu0
  %v162 = vadd.f32 %v108, %v161
  %v163 = vpop.f32.mrb[0].mxu0
  %v164 = vpop.f32.mrb[0].mxu0
  %v165 = vadd.f32 %v108, %v164
  %v166 = vpop.f32.mrb[0].mxu0
  %167 = vmatprep.mubr.bf16.mxu0 0
  %168 = vmatmul.mubr.bf16.gmra.mrb[0].mxu0 %v125
  %v169 = vpop.f32.mrb[0].mxu0
  %v170 = vadd.f32 %v108, %v169
  %v171 = vpop.f32.mrb[0].mxu0
  %v172 = vpop.f32.mrb[0].mxu0
  %v173 = vadd.f32 %v108, %v172
  %v174 = vpop.f32.mrb[0].mxu0
  %175 = vdwg.mxu0
  %v176 = vmax.f32 %v162, 0.0
  %v177 = vmax.f32 %v165, 0.0
  %v178 = vmax.f32 %v170, 0.0
  %v179 = vmax.f32 %v173, 0.0
  %v180 = vpack.c.bf16 %v177, %v176
  %v181 = vpack.c.bf16 %v179, %v178
  %s182 = scalar_lea.vmem %s2, 8
  %v183 = vld [vmem:[%s182] sm:$0xf]
  %v184 = vld [vmem:[%s182 + $0x4] sm:$0xf]
  %v187 = vunpack.c.l.b16 %v183
  %v188 = vunpack.c.l.b16 %v184
  %v189 = vpack.c.b16 %v188, %v187
  %v192 = vsel %vm45, %v180, 0
  %v195 = vsel %vm45, %v181, 0
  %197 = vmatprep.subr.bf16.mxu0 0
  %198 = vmatpush1.bf16.msra.mxu0 %v189
  %199 = vmatprep.subr.bf16.mxu0 0
  %200 = vmatpush1.bf16.msra.mxu0 0
  %201 = vmatprep.subr.bf16.mxu0 0
  %202 = vmatpush1.bf16.msra.mxu0 0
  %203 = vmatprep.subr.bf16.mxu0 0
  %204 = vmatpush1.bf16.msra.mxu0 0
  %205 = vmatprep.subr.bf16.mxu0 0
  %206 = vmatpush1.bf16.msra.mxu0 0
  %207 = vmatprep.subr.bf16.mxu0 0
  %208 = vmatpush1.bf16.msra.mxu0 0
  %209 = vmatprep.subr.bf16.mxu0 0
  %210 = vmatpush1.bf16.msra.mxu0 0
  %211 = vmatprep.subr.bf16.mxu0 0
  %212 = vmatpush1.bf16.msra.mxu0 0
  %213 = vmatprep.subr.bf16.mxu0 0
  %214 = vmatpush1.bf16.msra.mxu0 0
  %215 = vmatprep.subr.bf16.mxu0 0
  %216 = vmatpush1.bf16.msra.mxu0 0
  %217 = vmatprep.subr.bf16.mxu0 0
  %218 = vmatpush1.bf16.msra.mxu0 0
  %219 = vmatprep.subr.bf16.mxu0 0
  %220 = vmatpush1.bf16.msra.mxu0 0
  %221 = vmatprep.subr.bf16.mxu0 0
  %222 = vmatpush1.bf16.msra.mxu0 0
  %223 = vmatprep.subr.bf16.mxu0 0
  %224 = vmatpush1.bf16.msra.mxu0 0
  %225 = vmatprep.subr.bf16.mxu0 0
  %226 = vmatpush1.bf16.msra.mxu0 0
  %227 = vmatprep.subr.bf16.mxu0 0
  %228 = vmatpush1.bf16.msra.mxu0 0
  %229 = vmatprep.mubr.bf16.mxu0 0
  %230 = vmatmul.mubr.bf16.gmra.mrb[0].mxu0 %v192
  %v231 = vpop.f32.mrb[0].mxu0
  %v232 = vadd.f32 0.0, %v231
  %v233 = vpop.f32.mrb[0].mxu0
  %v234 = vpop.f32.mrb[0].mxu0
  %v235 = vadd.f32 0.0, %v234
  %v236 = vpop.f32.mrb[0].mxu0
  %237 = vmatprep.mubr.bf16.mxu0 0
  %238 = vmatmul.mubr.bf16.gmra.mrb[0].mxu0 %v195
  %v239 = vpop.f32.mrb[0].mxu0
  %v240 = vadd.f32 0.0, %v239
  %v241 = vpop.f32.mrb[0].mxu0
  %v242 = vpop.f32.mrb[0].mxu0
  %v243 = vadd.f32 0.0, %v242
  %v244 = vpop.f32.mrb[0].mxu0
  %245 = vdwg.mxu0
  %v246 = vpack.c.bf16 %v235, %v232
  %v247 = vpack.c.bf16 %v243, %v240
  %s248 = scalar_lea.vmem %s3, 1
  %v249 = vld [vmem:[%s248] sm:$0x1]
  %v251 = vlaneseq
  %v252 = vshrl.u32 %v251, 7
  %v253 = vsub.s32 0, %v252
  %v254 = vrot.slane %v249, %v253
  %256 = vmatprep.subr.bf16.mxu0 0
  %257 = vmatpush1.bf16.msra.mxu0 %v246
  %258 = vmatprep.subr.bf16.mxu0 0
  %259 = vmatpush1.bf16.msra.mxu0 %v247
  %260 = vmatprep.subr.bf16.mxu0 0
  %261 = vmatpush1.bf16.msra.mxu0 0
  %262 = vmatprep.subr.bf16.mxu0 0
  %263 = vmatpush1.bf16.msra.mxu0 0
  %264 = vmatprep.subr.bf16.mxu0 0
  %265 = vmatpush1.bf16.msra.mxu0 0
  %266 = vmatprep.subr.bf16.mxu0 0
  %267 = vmatpush1.bf16.msra.mxu0 0
  %268 = vmatprep.subr.bf16.mxu0 0
  %269 = vmatpush1.bf16.msra.mxu0 0
  %270 = vmatprep.subr.bf16.mxu0 0
  %271 = vmatpush1.bf16.msra.mxu0 0
  %272 = vmatprep.subr.bf16.mxu0 0
  %273 = vmatpush1.bf16.msra.mxu0 0
  %274 = vmatprep.subr.bf16.mxu0 0
  %275 = vmatpush1.bf16.msra.mxu0 0
  %276 = vmatprep.subr.bf16.mxu0 0
  %277 = vmatpush1.bf16.msra.mxu0 0
  %278 = vmatprep.subr.bf16.mxu0 0
  %279 = vmatpush1.bf16.msra.mxu0 0
  %280 = vmatprep.subr.bf16.mxu0 0
  %281 = vmatpush1.bf16.msra.mxu0 0
  %282 = vmatprep.subr.bf16.mxu0 0
  %283 = vmatpush1.bf16.msra.mxu0 0
  %284 = vmatprep.subr.bf16.mxu0 0
  %285 = vmatpush1.bf16.msra.mxu0 0
  %286 = vmatprep.subr.bf16.mxu0 0
  %287 = vmatpush1.bf16.msra.mxu0 0
  %288 = vmatprep.mubr.bf16.mxu0 0
  %289 = vmatmul.mubr.bf16.gmra.mrb[0].mxu0 %v122
  %v290 = vpop.f32.mrb[0].mxu0
  %v291 = vadd.f32 %v254, %v290
  %v292 = vpop.f32.mrb[0].mxu0
  %v293 = vpop.f32.mrb[0].mxu0
  %v294 = vadd.f32 %v254, %v293
  %v295 = vpop.f32.mrb[0].mxu0
  %296 = vmatprep.mubr.bf16.mxu0 0
  %297 = vmatmul.mubr.bf16.gmra.mrb[0].mxu0 %v125
  %v298 = vpop.f32.mrb[0].mxu0
  %v299 = vadd.f32 %v254, %v298
  %v300 = vpop.f32.mrb[0].mxu0
  %v301 = vpop.f32.mrb[0].mxu0
  %v302 = vadd.f32 %v254, %v301
  %v303 = vpop.f32.mrb[0].mxu0
  %304 = vdwg.mxu0
  %v305 = vmax.f32 %v291, 0.0
  %v306 = vmax.f32 %v294, 0.0
  %v307 = vmax.f32 %v299, 0.0
  %v308 = vmax.f32 %v302, 0.0
  %v309 = vpack.c.bf16 %v306, %v305
  %v310 = vpack.c.bf16 %v308, %v307
  %s311 = scalar_lea.vmem %s2, 16
  %v312 = vld [vmem:[%s311] sm:$0xf]
  %v313 = vld [vmem:[%s311 + $0x4] sm:$0xf]
  %v316 = vunpack.c.l.b16 %v312
  %v317 = vunpack.c.l.b16 %v313
  %v318 = vpack.c.b16 %v317, %v316
  %v321 = vsel %vm45, %v309, 0
  %v324 = vsel %vm45, %v310, 0
  %326 = vmatprep.subr.bf16.mxu0 0
  %327 = vmatpush1.bf16.msra.mxu0 %v318
  %328 = vmatprep.subr.bf16.mxu0 0
  %329 = vmatpush1.bf16.msra.mxu0 0
  %330 = vmatprep.subr.bf16.mxu0 0
  %331 = vmatpush1.bf16.msra.mxu0 0
  %332 = vmatprep.subr.bf16.mxu0 0
  %333 = vmatpush1.bf16.msra.mxu0 0
  %334 = vmatprep.subr.bf16.mxu0 0
  %335 = vmatpush1.bf16.msra.mxu0 0
  %336 = vmatprep.subr.bf16.mxu0 0
  %337 = vmatpush1.bf16.msra.mxu0 0
  %338 = vmatprep.subr.bf16.mxu0 0
  %339 = vmatpush1.bf16.msra.mxu0 0
  %340 = vmatprep.subr.bf16.mxu0 0
  %341 = vmatpush1.bf16.msra.mxu0 0
  %342 = vmatprep.subr.bf16.mxu0 0
  %343 = vmatpush1.bf16.msra.mxu0 0
  %344 = vmatprep.subr.bf16.mxu0 0
  %345 = vmatpush1.bf16.msra.mxu0 0
  %346 = vmatprep.subr.bf16.mxu0 0
  %347 = vmatpush1.bf16.msra.mxu0 0
  %348 = vmatprep.subr.bf16.mxu0 0
  %349 = vmatpush1.bf16.msra.mxu0 0
  %350 = vmatprep.subr.bf16.mxu0 0
  %351 = vmatpush1.bf16.msra.mxu0 0
  %352 = vmatprep.subr.bf16.mxu0 0
  %353 = vmatpush1.bf16.msra.mxu0 0
  %354 = vmatprep.subr.bf16.mxu0 0
  %355 = vmatpush1.bf16.msra.mxu0 0
  %356 = vmatprep.subr.bf16.mxu0 0
  %357 = vmatpush1.bf16.msra.mxu0 0
  %358 = vmatprep.mubr.bf16.mxu0 0
  %359 = vmatmul.mubr.bf16.gmra.mrb[0].mxu0 %v321
  %v360 = vpop.f32.mrb[0].mxu0
  %v361 = vadd.f32 0.0, %v360
  %v362 = vpop.f32.mrb[0].mxu0
  %v363 = vpop.f32.mrb[0].mxu0
  %v364 = vadd.f32 0.0, %v363
  %v365 = vpop.f32.mrb[0].mxu0
  %366 = vmatprep.mubr.bf16.mxu0 0
  %367 = vmatmul.mubr.bf16.gmra.mrb[0].mxu0 %v324
  %v368 = vpop.f32.mrb[0].mxu0
  %v369 = vadd.f32 0.0, %v368
  %v370 = vpop.f32.mrb[0].mxu0
  %v371 = vpop.f32.mrb[0].mxu0
  %v372 = vadd.f32 0.0, %v371
  %v373 = vpop.f32.mrb[0].mxu0
  %374 = vdwg.mxu0
  %v375 = vpack.c.bf16 %v364, %v361
  %v376 = vpack.c.bf16 %v372, %v369
  %s377 = scalar_lea.vmem %s3, 2
  %v378 = vld [vmem:[%s377] sm:$0x1]
  %v380 = vlaneseq
  %v381 = vshrl.u32 %v380, 7
  %v382 = vsub.s32 0, %v381
  %v383 = vrot.slane %v378, %v382
  %385 = vmatprep.subr.bf16.mxu0 0
  %386 = vmatpush1.bf16.msra.mxu0 %v375
  %387 = vmatprep.subr.bf16.mxu0 0
  %388 = vmatpush1.bf16.msra.mxu0 %v376
  %389 = vmatprep.subr.bf16.mxu0 0
  %390 = vmatpush1.bf16.msra.mxu0 0
  %391 = vmatprep.subr.bf16.mxu0 0
  %392 = vmatpush1.bf16.msra.mxu0 0
  %393 = vmatprep.subr.bf16.mxu0 0
  %394 = vmatpush1.bf16.msra.mxu0 0
  %395 = vmatprep.subr.bf16.mxu0 0
  %396 = vmatpush1.bf16.msra.mxu0 0
  %397 = vmatprep.subr.bf16.mxu0 0
  %398 = vmatpush1.bf16.msra.mxu0 0
  %399 = vmatprep.subr.bf16.mxu0 0
  %400 = vmatpush1.bf16.msra.mxu0 0
  %401 = vmatprep.subr.bf16.mxu0 0
  %402 = vmatpush1.bf16.msra.mxu0 0
  %403 = vmatprep.subr.bf16.mxu0 0
  %404 = vmatpush1.bf16.msra.mxu0 0
  %405 = vmatprep.subr.bf16.mxu0 0
  %406 = vmatpush1.bf16.msra.mxu0 0
  %407 = vmatprep.subr.bf16.mxu0 0
  %408 = vmatpush1.bf16.msra.mxu0 0
  %409 = vmatprep.subr.bf16.mxu0 0
  %410 = vmatpush1.bf16.msra.mxu0 0
  %411 = vmatprep.subr.bf16.mxu0 0
  %412 = vmatpush1.bf16.msra.mxu0 0
  %413 = vmatprep.subr.bf16.mxu0 0
  %414 = vmatpush1.bf16.msra.mxu0 0
  %415 = vmatprep.subr.bf16.mxu0 0
  %416 = vmatpush1.bf16.msra.mxu0 0
  %417 = vmatprep.mubr.bf16.mxu0 0
  %418 = vmatmul.mubr.bf16.gmra.mrb[0].mxu0 %v122
  %v419 = vpop.f32.mrb[0].mxu0
  %v420 = vadd.f32 %v383, %v419
  %v421 = vpop.f32.mrb[0].mxu0
  %v422 = vpop.f32.mrb[0].mxu0
  %v423 = vadd.f32 %v383, %v422
  %v424 = vpop.f32.mrb[0].mxu0
  %425 = vmatprep.mubr.bf16.mxu0 0
  %426 = vmatmul.mubr.bf16.gmra.mrb[0].mxu0 %v125
  %v427 = vpop.f32.mrb[0].mxu0
  %v428 = vadd.f32 %v383, %v427
  %v429 = vpop.f32.mrb[0].mxu0
  %v430 = vpop.f32.mrb[0].mxu0
  %v431 = vadd.f32 %v383, %v430
  %v432 = vpop.f32.mrb[0].mxu0
  %433 = vdwg.mxu0
  %v434 = vmax.f32 %v420, 0.0
  %v435 = vmax.f32 %v423, 0.0
  %v436 = vmax.f32 %v428, 0.0
  %v437 = vmax.f32 %v431, 0.0
  %v438 = vpack.c.bf16 %v435, %v434
  %v439 = vpack.c.bf16 %v437, %v436
  %s440 = scalar_lea.vmem %s2, 24
  %v441 = vld [vmem:[%s440] sm:$0xf]
  %v442 = vld [vmem:[%s440 + $0x4] sm:$0xf]
  %v445 = vunpack.c.l.b16 %v441
  %v446 = vunpack.c.l.b16 %v442
  %v447 = vpack.c.b16 %v446, %v445
  %v450 = vsel %vm45, %v438, 0
  %v453 = vsel %vm45, %v439, 0
  %455 = vmatprep.subr.bf16.mxu0 0
  %456 = vmatpush1.bf16.msra.mxu0 %v447
  %457 = vmatprep.subr.bf16.mxu0 0
  %458 = vmatpush1.bf16.msra.mxu0 0
  %459 = vmatprep.subr.bf16.mxu0 0
  %460 = vmatpush1.bf16.msra.mxu0 0
  %461 = vmatprep.subr.bf16.mxu0 0
  %462 = vmatpush1.bf16.msra.mxu0 0
  %463 = vmatprep.subr.bf16.mxu0 0
  %464 = vmatpush1.bf16.msra.mxu0 0
  %465 = vmatprep.subr.bf16.mxu0 0
  %466 = vmatpush1.bf16.msra.mxu0 0
  %467 = vmatprep.subr.bf16.mxu0 0
  %468 = vmatpush1.bf16.msra.mxu0 0
  %469 = vmatprep.subr.bf16.mxu0 0
  %470 = vmatpush1.bf16.msra.mxu0 0
  %471 = vmatprep.subr.bf16.mxu0 0
  %472 = vmatpush1.bf16.msra.mxu0 0
  %473 = vmatprep.subr.bf16.mxu0 0
  %474 = vmatpush1.bf16.msra.mxu0 0
  %475 = vmatprep.subr.bf16.mxu0 0
  %476 = vmatpush1.bf16.msra.mxu0 0
  %477 = vmatprep.subr.bf16.mxu0 0
  %478 = vmatpush1.bf16.msra.mxu0 0
  %479 = vmatprep.subr.bf16.mxu0 0
  %480 = vmatpush1.bf16.msra.mxu0 0
  %481 = vmatprep.subr.bf16.mxu0 0
  %482 = vmatpush1.bf16.msra.mxu0 0
  %483 = vmatprep.subr.bf16.mxu0 0
  %484 = vmatpush1.bf16.msra.mxu0 0
  %485 = vmatprep.subr.bf16.mxu0 0
  %486 = vmatpush1.bf16.msra.mxu0 0
  %487 = vmatprep.mubr.bf16.mxu0 0
  %488 = vmatmul.mubr.bf16.gmra.mrb[0].mxu0 %v450
  %v489 = vpop.f32.mrb[0].mxu0
  %v490 = vadd.f32 0.0, %v489
  %v491 = vpop.f32.mrb[0].mxu0
  %v492 = vpop.f32.mrb[0].mxu0
  %v493 = vadd.f32 0.0, %v492
  %v494 = vpop.f32.mrb[0].mxu0
  %495 = vmatprep.mubr.bf16.mxu0 0
  %496 = vmatmul.mubr.bf16.gmra.mrb[0].mxu0 %v453
  %v497 = vpop.f32.mrb[0].mxu0
  %v498 = vadd.f32 0.0, %v497
  %v499 = vpop.f32.mrb[0].mxu0
  %v500 = vpop.f32.mrb[0].mxu0
  %v501 = vadd.f32 0.0, %v500
  %v502 = vpop.f32.mrb[0].mxu0
  %503 = vdwg.mxu0
  %v504 = vpack.c.bf16 %v493, %v490
  %v505 = vpack.c.bf16 %v501, %v498
  %s506 = scalar_lea.vmem %s3, 3
  %v507 = vld [vmem:[%s506] sm:$0x1]
  %v509 = vlaneseq
  %v510 = vshrl.u32 %v509, 7
  %v511 = vsub.s32 0, %v510
  %v512 = vrot.slane %v507, %v511
  %514 = vmatprep.subr.bf16.mxu0 0
  %515 = vmatpush1.bf16.msra.mxu0 %v504
  %516 = vmatprep.subr.bf16.mxu0 0
  %517 = vmatpush1.bf16.msra.mxu0 %v505
  %518 = vmatprep.subr.bf16.mxu0 0
  %519 = vmatpush1.bf16.msra.mxu0 0
  %520 = vmatprep.subr.bf16.mxu0 0
  %521 = vmatpush1.bf16.msra.mxu0 0
  %522 = vmatprep.subr.bf16.mxu0 0
  %523 = vmatpush1.bf16.msra.mxu0 0
  %524 = vmatprep.subr.bf16.mxu0 0
  %525 = vmatpush1.bf16.msra.mxu0 0
  %526 = vmatprep.subr.bf16.mxu0 0
  %527 = vmatpush1.bf16.msra.mxu0 0
  %528 = vmatprep.subr.bf16.mxu0 0
  %529 = vmatpush1.bf16.msra.mxu0 0
  %530 = vmatprep.subr.bf16.mxu0 0
  %531 = vmatpush1.bf16.msra.mxu0 0
  %532 = vmatprep.subr.bf16.mxu0 0
  %533 = vmatpush1.bf16.msra.mxu0 0
  %534 = vmatprep.subr.bf16.mxu0 0
  %535 = vmatpush1.bf16.msra.mxu0 0
  %536 = vmatprep.subr.bf16.mxu0 0
  %537 = vmatpush1.bf16.msra.mxu0 0
  %538 = vmatprep.subr.bf16.mxu0 0
  %539 = vmatpush1.bf16.msra.mxu0 0
  %540 = vmatprep.subr.bf16.mxu0 0
  %541 = vmatpush1.bf16.msra.mxu0 0
  %542 = vmatprep.subr.bf16.mxu0 0
  %543 = vmatpush1.bf16.msra.mxu0 0
  %544 = vmatprep.subr.bf16.mxu0 0
  %545 = vmatpush1.bf16.msra.mxu0 0
  %546 = vmatprep.mubr.bf16.mxu0 0
  %547 = vmatmul.mubr.bf16.gmra.mrb[0].mxu0 %v122
  %v548 = vpop.f32.mrb[0].mxu0
  %v549 = vadd.f32 %v512, %v548
  %v550 = vpop.f32.mrb[0].mxu0
  %v551 = vpop.f32.mrb[0].mxu0
  %v552 = vadd.f32 %v512, %v551
  %v553 = vpop.f32.mrb[0].mxu0
  %554 = vmatprep.mubr.bf16.mxu0 0
  %555 = vmatmul.mubr.bf16.gmra.mrb[0].mxu0 %v125
  %v556 = vpop.f32.mrb[0].mxu0
  %v557 = vadd.f32 %v512, %v556
  %v558 = vpop.f32.mrb[0].mxu0
  %v559 = vpop.f32.mrb[0].mxu0
  %v560 = vadd.f32 %v512, %v559
  %v561 = vpop.f32.mrb[0].mxu0
  %562 = vdwg.mxu0
  %v563 = vmax.f32 %v549, 0.0
  %v564 = vmax.f32 %v552, 0.0
  %v565 = vmax.f32 %v557, 0.0
  %v566 = vmax.f32 %v560, 0.0
  %v567 = vpack.c.bf16 %v564, %v563
  %v568 = vpack.c.bf16 %v566, %v565
  %s569 = scalar_lea.vmem %s2, 32
  %v570 = vld [vmem:[%s569] sm:$0xf]
  %v571 = vld [vmem:[%s569 + $0x4] sm:$0xf]
  %v574 = vunpack.c.l.b16 %v570
  %v575 = vunpack.c.l.b16 %v571
  %v576 = vpack.c.b16 %v575, %v574
  %v579 = vsel %vm45, %v567, 0
  %v582 = vsel %vm45, %v568, 0
  %584 = vmatprep.subr.bf16.mxu0 0
  %585 = vmatpush1.bf16.msra.mxu0 %v576
  %586 = vmatprep.subr.bf16.mxu0 0
  %587 = vmatpush1.bf16.msra.mxu0 0
  %588 = vmatprep.subr.bf16.mxu0 0
  %589 = vmatpush1.bf16.msra.mxu0 0
  %590 = vmatprep.subr.bf16.mxu0 0
  %591 = vmatpush1.bf16.msra.mxu0 0
  %592 = vmatprep.subr.bf16.mxu0 0
  %593 = vmatpush1.bf16.msra.mxu0 0
  %594 = vmatprep.subr.bf16.mxu0 0
  %595 = vmatpush1.bf16.msra.mxu0 0
  %596 = vmatprep.subr.bf16.mxu0 0
  %597 = vmatpush1.bf16.msra.mxu0 0
  %598 = vmatprep.subr.bf16.mxu0 0
  %599 = vmatpush1.bf16.msra.mxu0 0
  %600 = vmatprep.subr.bf16.mxu0 0
  %601 = vmatpush1.bf16.msra.mxu0 0
  %602 = vmatprep.subr.bf16.mxu0 0
  %603 = vmatpush1.bf16.msra.mxu0 0
  %604 = vmatprep.subr.bf16.mxu0 0
  %605 = vmatpush1.bf16.msra.mxu0 0
  %606 = vmatprep.subr.bf16.mxu0 0
  %607 = vmatpush1.bf16.msra.mxu0 0
  %608 = vmatprep.subr.bf16.mxu0 0
  %609 = vmatpush1.bf16.msra.mxu0 0
  %610 = vmatprep.subr.bf16.mxu0 0
  %611 = vmatpush1.bf16.msra.mxu0 0
  %612 = vmatprep.subr.bf16.mxu0 0
  %613 = vmatpush1.bf16.msra.mxu0 0
  %614 = vmatprep.subr.bf16.mxu0 0
  %615 = vmatpush1.bf16.msra.mxu0 0
  %616 = vmatprep.mubr.bf16.mxu0 0
  %617 = vmatmul.mubr.bf16.gmra.mrb[0].mxu0 %v579
  %v618 = vpop.f32.mrb[0].mxu0
  %v619 = vadd.f32 0.0, %v618
  %v620 = vpop.f32.mrb[0].mxu0
  %v621 = vpop.f32.mrb[0].mxu0
  %v622 = vadd.f32 0.0, %v621
  %v623 = vpop.f32.mrb[0].mxu0
  %624 = vmatprep.mubr.bf16.mxu0 0
  %625 = vmatmul.mubr.bf16.gmra.mrb[0].mxu0 %v582
  %v626 = vpop.f32.mrb[0].mxu0
  %v627 = vadd.f32 0.0, %v626
  %v628 = vpop.f32.mrb[0].mxu0
  %v629 = vpop.f32.mrb[0].mxu0
  %v630 = vadd.f32 0.0, %v629
  %v631 = vpop.f32.mrb[0].mxu0
  %632 = vdwg.mxu0
  %v633 = vpack.c.bf16 %v622, %v619
  %v634 = vpack.c.bf16 %v630, %v627
  %s635 = scalar_lea.vmem %s3, 4
  %v636 = vld [vmem:[%s635] sm:$0x1]
  %v638 = vlaneseq
  %v639 = vshrl.u32 %v638, 7
  %v640 = vsub.s32 0, %v639
  %v641 = vrot.slane %v636, %v640
  %643 = vmatprep.subr.bf16.mxu0 0
  %644 = vmatpush1.bf16.msra.mxu0 %v633
  %645 = vmatprep.subr.bf16.mxu0 0
  %646 = vmatpush1.bf16.msra.mxu0 %v634
  %647 = vmatprep.subr.bf16.mxu0 0
  %648 = vmatpush1.bf16.msra.mxu0 0
  %649 = vmatprep.subr.bf16.mxu0 0
  %650 = vmatpush1.bf16.msra.mxu0 0
  %651 = vmatprep.subr.bf16.mxu0 0
  %652 = vmatpush1.bf16.msra.mxu0 0
  %653 = vmatprep.subr.bf16.mxu0 0
  %654 = vmatpush1.bf16.msra.mxu0 0
  %655 = vmatprep.subr.bf16.mxu0 0
  %656 = vmatpush1.bf16.msra.mxu0 0
  %657 = vmatprep.subr.bf16.mxu0 0
  %658 = vmatpush1.bf16.msra.mxu0 0
  %659 = vmatprep.subr.bf16.mxu0 0
  %660 = vmatpush1.bf16.msra.mxu0 0
  %661 = vmatprep.subr.bf16.mxu0 0
  %662 = vmatpush1.bf16.msra.mxu0 0
  %663 = vmatprep.subr.bf16.mxu0 0
  %664 = vmatpush1.bf16.msra.mxu0 0
  %665 = vmatprep.subr.bf16.mxu0 0
  %666 = vmatpush1.bf16.msra.mxu0 0
  %667 = vmatprep.subr.bf16.mxu0 0
  %668 = vmatpush1.bf16.msra.mxu0 0
  %669 = vmatprep.subr.bf16.mxu0 0
  %670 = vmatpush1.bf16.msra.mxu0 0
  %671 = vmatprep.subr.bf16.mxu0 0
  %672 = vmatpush1.bf16.msra.mxu0 0
  %673 = vmatprep.subr.bf16.mxu0 0
  %674 = vmatpush1.bf16.msra.mxu0 0
  %675 = vmatprep.mubr.bf16.mxu0 0
  %676 = vmatmul.mubr.bf16.gmra.mrb[0].mxu0 %v122
  %v677 = vpop.f32.mrb[0].mxu0
  %v678 = vadd.f32 %v641, %v677
  %v679 = vpop.f32.mrb[0].mxu0
  %v680 = vpop.f32.mrb[0].mxu0
  %v681 = vadd.f32 %v641, %v680
  %v682 = vpop.f32.mrb[0].mxu0
  %683 = vmatprep.mubr.bf16.mxu0 0
  %684 = vmatmul.mubr.bf16.gmra.mrb[0].mxu0 %v125
  %v685 = vpop.f32.mrb[0].mxu0
  %v686 = vadd.f32 %v641, %v685
  %v687 = vpop.f32.mrb[0].mxu0
  %v688 = vpop.f32.mrb[0].mxu0
  %v689 = vadd.f32 %v641, %v688
  %v690 = vpop.f32.mrb[0].mxu0
  %691 = vdwg.mxu0
  %692 = vst.msk [vmem:[%s5] sm:$0xff] %vm45, %v678
  %693 = vst.msk [vmem:[%s5 + $0x8] sm:$0xff] %vm45, %v681
  %694 = vst.msk [vmem:[%s5 + $0x10] sm:$0xff] %vm45, %v686
  %695 = vst.msk [vmem:[%s5 + $0x18] sm:$0xff] %vm45, %v689
  %v696 = vld [vmem:[%s4] sm:$0x1]
  %v698 = vlaneseq
  %v699 = vshrl.u32 %v698, 7
  %v700 = vsub.s32 0, %v699
  %v701 = vrot.slane %v696, %v700
  %v703 = vmul.f32 %v678, %v701
  %v704 = vmul.f32 %v681, %v701
  %v705 = vmul.f32 %v686, %v701
  %v706 = vmul.f32 %v689, %v701
  %v707 = vsel %vm45, %v703, 0.0
  %708 = vadd.xlane.f32.xlu0 %v707
  %v709 = vpop.xlane.xlu0 %708
  %v710 = vsel %vm45, %v704, 0.0
  %711 = vadd.xlane.f32.xlu0 %v710
  %v712 = vpop.xlane.xlu0 %711
  %v713 = vsel %vm45, %v705, 0.0
  %714 = vadd.xlane.f32.xlu0 %v713
  %v715 = vpop.xlane.xlu0 %714
  %v716 = vsel %vm45, %v706, 0.0
  %717 = vadd.xlane.f32.xlu0 %v716
  %v718 = vpop.xlane.xlu0 %717
  %v719 = vtanh.pop %v709
  %v720 = vtanh.pop %v712
  %v721 = vtanh.pop %v715
  %v722 = vtanh.pop %v718
  %vm723 = vcmask 7168
  %724 = vst.msk [vmem:[%s6] sm:$0xff] %vm723, %v719
  %725 = vst.msk [vmem:[%s6 + $0x8] sm:$0xff] %vm723, %v720
  %726 = vst.msk [vmem:[%s6 + $0x10] sm:$0xff] %vm723, %v721
  %727 = vst.msk [vmem:[%s6 + $0x18] sm:$0xff] %vm723, %v722
  // Predicated region
  $region22: #{forward.6} parent=0 // pred_check
    _
  $region23: #{forward.6} parent=0 // pred_check_branch
    %729 = sbr.rel (0) target = $region25
  $region24: #{forward.6} parent=0 // pred_region
    _
  $region25: #{forward.6} parent=0 // pred_fallthru
    _
  // Predicated region
  $region26: #{forward.6} parent=0 // pred_check
    _
  $region27: #{forward.6} parent=0 // pred_check_branch
    %731 = sbr.rel (0) target = $region29
  $region28: #{forward.6} parent=0 // pred_region
    _
  $region29: #{forward.6} parent=0 // pred_fallthru
    _
  // Predicated region
  $region30: #{forward.6} parent=0 // pred_check
    _
  $region31: #{forward.6} parent=0 // pred_check_branch
    %733 = sbr.rel (0) target = $region33
  $region32: #{forward.6} parent=0 // pred_region
    _
  $region33: #{forward.6} parent=0 // pred_fallthru
    _
  // Predicated region
  $region34: #{forward.6} parent=0 // pred_check
    _
  $region35: #{forward.6} parent=0 // pred_check_branch
    %735 = sbr.rel (0) target = $region37
  $region36: #{forward.6} parent=0 // pred_region
    _
  $region37: #{forward.6} parent=0 // pred_fallthru
    _

// kernel: forward.9
$region0: #{forward.9}
  #allocation0 [shape = 'u32[]', space=smem, size = 0x4, offset = 0x4, fixed_abs, tag = 'smem constant byte address 0x4 - core index']
  #allocation1 [shape = 'u32[144,128]{1,0:T(1,128)}', space=vmem, size = 0x12000, scoped, tag = 'internal scratch']
  %s0 = inlined_call_operand.vmem [shape: bf16[2,32], index: 0, kind: input, shape index: {}]
  %s1 = inlined_call_operand.vmem [shape: bf16[32,16], index: 1, kind: input, shape index: {}]
  %s2 = inlined_call_operand.vmem [shape: bf16[16,4], index: 2, kind: input, shape index: {}]
  %s3 = inlined_call_operand.vmem [shape: f32[1,4], index: 3, kind: input, shape index: {}]
  %s4 = inlined_call_operand.hbm [shape: f32[2,4], index: 4, kind: output, shape index: {}]
  %s5 = sld [smem:[#allocation0]]
  $region26: #{forward.9} parent=0
    _
  %s7 = ssub.s32 1, %s5
  %s8 = scalar_select 0, %s7, %s5
  $region1: #{forward.9} parent=0
    #allocation2 [shape = 'u8[1024]{0}', space=vmem, size = 0x400, scoped, tag = 'output window, operand 0, single buffered']
    #allocation3 [shape = 's32[1]{0}', space=sflag, size = 0x4, scoped, tag = 'scoped memory for forward.9']
    %9 = vsyncpa [#allocation3], 0
    // Predicated region
    $region2: #{forward.9} parent=1 // pred_check
      _
    $region3: #{forward.9} parent=1 // pred_check_branch
      %11 = sbr.rel (0) target = $region5
    $region4: #{forward.9} parent=1 // pred_region
      _
    $region5: #{forward.9} parent=1 // pred_fallthru
      _
    // Predicated region
    $region6: #{forward.9} parent=1 // pred_check
      _
    $region7: #{forward.9} parent=1 // pred_check_branch
      %13 = sbr.rel (0) target = $region9
    $region8: #{forward.9} parent=1 // pred_region
      _
    $region9: #{forward.9} parent=1 // pred_fallthru
      _
    // Predicated region
    $region10: #{forward.9} parent=1 // pred_check
      _
    $region11: #{forward.9} parent=1 // pred_check_branch
      %15 = sbr.rel (0) target = $region13
    $region12: #{forward.9} parent=1 // pred_region
      _
    $region13: #{forward.9} parent=1 // pred_fallthru
      _
    // Predicated region
    $region14: #{forward.9} parent=1 // pred_check
      _
    $region15: #{forward.9} parent=1 // pred_check_branch
      %17 = sbr.rel (0) target = $region17
    $region16: #{forward.9} parent=1 // pred_region
      _
    $region17: #{forward.9} parent=1 // pred_fallthru
      _
    %v19 = vld [vmem:[%s0] sm:$0x1]
    %v20 = vld [vmem:[%s1] sm:$0xf]
    %v21 = vld [vmem:[%s1 + $0x4] sm:$0xf]
    %v22 = vld [vmem:[%s1 + $0x8] sm:$0xf]
    %v23 = vld [vmem:[%s1 + $0xc] sm:$0xf]
    %v28 = vunpack.c.l.b16 %v20
    %v29 = vunpack.c.l.b16 %v21
    %v30 = vunpack.c.l.b16 %v22
    %v31 = vunpack.c.l.b16 %v23
    %v32 = vpack.c.b16 %v29, %v28
    %v33 = vpack.c.b16 %v31, %v30
    %vm36 = vcmask 261120
    %v38 = vsel %vm36, %v19, 0
    %40 = vmatprep.subr.bf16.mxu0 0
    %41 = vmatpush1.bf16.msra.mxu0 %v32
    %42 = vmatprep.subr.bf16.mxu0 0
    %43 = vmatpush1.bf16.msra.mxu0 %v33
    %44 = vmatprep.subr.bf16.mxu0 0
    %45 = vmatpush1.bf16.msra.mxu0 0
    %46 = vmatprep.subr.bf16.mxu0 0
    %47 = vmatpush1.bf16.msra.mxu0 0
    %48 = vmatprep.subr.bf16.mxu0 0
    %49 = vmatpush1.bf16.msra.mxu0 0
    %50 = vmatprep.subr.bf16.mxu0 0
    %51 = vmatpush1.bf16.msra.mxu0 0
    %52 = vmatprep.subr.bf16.mxu0 0
    %53 = vmatpush1.bf16.msra.mxu0 0
    %54 = vmatprep.subr.bf16.mxu0 0
    %55 = vmatpush1.bf16.msra.mxu0 0
    %56 = vmatprep.subr.bf16.mxu0 0
    %57 = vmatpush1.bf16.msra.mxu0 0
    %58 = vmatprep.subr.bf16.mxu0 0
    %59 = vmatpush1.bf16.msra.mxu0 0
    %60 = vmatprep.subr.bf16.mxu0 0
    %61 = vmatpush1.bf16.msra.mxu0 0
    %62 = vmatprep.subr.bf16.mxu0 0
    %63 = vmatpush1.bf16.msra.mxu0 0
    %64 = vmatprep.subr.bf16.mxu0 0
    %65 = vmatpush1.bf16.msra.mxu0 0
    %66 = vmatprep.subr.bf16.mxu0 0
    %67 = vmatpush1.bf16.msra.mxu0 0
    %68 = vmatprep.subr.bf16.mxu0 0
    %69 = vmatpush1.bf16.msra.mxu0 0
    %70 = vmatprep.subr.bf16.mxu0 0
    %71 = vmatpush1.bf16.msra.mxu0 0
    %72 = vmatprep.mubr.bf16.mxu0 0
    %73 = vmatmul.mubr.bf16.gmra.mrb[0].mxu0 %v38
    %v74 = vpop.f32.mrb[0].mxu0
    %v75 = vadd.f32 0.0, %v74
    %v76 = vpop.f32.mrb[0].mxu0
    %v77 = vpop.f32.mrb[0].mxu0
    %v78 = vpop.f32.mrb[0].mxu0
    %79 = vdwg.mxu0
    %v80 = vpack.c.bf16 %v75, %v75
    %v81 = vld [vmem:[%s2] sm:$0xf]
    %v82 = vld [vmem:[%s2 + $0x4] sm:$0xf]
    %v83 = vld [vmem:[%s3] sm:$0x1]
    %v85 = vlaneseq
    %v86 = vshrl.u32 %v85, 7
    %v87 = vsub.s32 0, %v86
    %v88 = vrot.slane %v83, %v87
    %v92 = vunpack.c.l.b16 %v81
    %v93 = vunpack.c.l.b16 %v82
    %v94 = vpack.c.b16 %v93, %v92
    %vm96 = vcmask 130048
    %v98 = vsel %vm96, %v80, 0
    %100 = vmatprep.subr.bf16.mxu0 0
    %101 = vmatpush1.bf16.msra.mxu0 %v94
    %102 = vmatprep.subr.bf16.mxu0 0
    %103 = vmatpush1.bf16.msra.mxu0 0
    %104 = vmatprep.subr.bf16.mxu0 0
    %105 = vmatpush1.bf16.msra.mxu0 0
    %106 = vmatprep.subr.bf16.mxu0 0
    %107 = vmatpush1.bf16.msra.mxu0 0
    %108 = vmatprep.subr.bf16.mxu0 0
    %109 = vmatpush1.bf16.msra.mxu0 0
    %110 = vmatprep.subr.bf16.mxu0 0
    %111 = vmatpush1.bf16.msra.mxu0 0
    %112 = vmatprep.subr.bf16.mxu0 0
    %113 = vmatpush1.bf16.msra.mxu0 0
    %114 = vmatprep.subr.bf16.mxu0 0
    %115 = vmatpush1.bf16.msra.mxu0 0
    %116 = vmatprep.subr.bf16.mxu0 0
    %117 = vmatpush1.bf16.msra.mxu0 0
    %118 = vmatprep.subr.bf16.mxu0 0
    %119 = vmatpush1.bf16.msra.mxu0 0
    %120 = vmatprep.subr.bf16.mxu0 0
    %121 = vmatpush1.bf16.msra.mxu0 0
    %122 = vmatprep.subr.bf16.mxu0 0
    %123 = vmatpush1.bf16.msra.mxu0 0
    %124 = vmatprep.subr.bf16.mxu0 0
    %125 = vmatpush1.bf16.msra.mxu0 0
    %126 = vmatprep.subr.bf16.mxu0 0
    %127 = vmatpush1.bf16.msra.mxu0 0
    %128 = vmatprep.subr.bf16.mxu0 0
    %129 = vmatpush1.bf16.msra.mxu0 0
    %130 = vmatprep.subr.bf16.mxu0 0
    %131 = vmatpush1.bf16.msra.mxu0 0
    %132 = vmatprep.mubr.bf16.mxu0 0
    %133 = vmatmul.mubr.bf16.gmra.mrb[0].mxu0 %v98
    %v134 = vpop.f32.mrb[0].mxu0
    %v135 = vadd.f32 %v88, %v134
    %v136 = vpop.f32.mrb[0].mxu0
    %v137 = vpop.f32.mrb[0].mxu0
    %v138 = vpop.f32.mrb[0].mxu0
    %139 = vdwg.mxu0
    %vm140 = vcmask 25600
    %141 = vst.msk [vmem:[#allocation2] sm:$0x3] %vm140, %v135
    // Predicated region
    $region18: #{forward.9} parent=1 // pred_check
      _
    $region19: #{forward.9} parent=1 // pred_check_branch
      %143 = sbr.rel (0) target = $region21
    $region20: #{forward.9} parent=1 // pred_region
      %s145 = ssub.s32 32, 32
      %146 = vsyncadd [#allocation3], %s145
      %s148 = sshll.u32 [#allocation2], 4
      %s149 = int_to_ptr.vmem [resolvable:$true] %s148
      %151 = dma.vmem_to_hbm [thread:$0]  %s149, 32, %s4, [#allocation3]
    $region21: #{forward.9} parent=1 // pred_fallthru
      _
    // Predicated region
    $region22: #{forward.9} parent=1 // pred_check
      _
    $region23: #{forward.9} parent=1 // pred_check_branch
      %153 = sbr.rel (0) target = $region25
    $region24: #{forward.9} parent=1 // pred_region
      %154 = dma.done [#allocation3], 32
    $region25: #{forward.9} parent=1 // pred_fallthru
      _
    %155 = vsyncpa [#allocation3], 1

</llo_original>
